<compile_context>
chip_gen: v7x
topology: tpu7x:2x2x1
jax: 0.10.0
libtpu: 0.0.40
codegen_flags: <defaults>
</compile_context>

<pallas_src>
import math

import jax
import jax.numpy as jnp
from jax.experimental import pallas as pl
from jax.experimental.pallas import tpu as pltpu


def _copy_kernel(x_ref, o_ref):
    # (row_block, COLS) VMEM tiles: sublane-dense, lane-dense straight copy.
    o_ref[...] = x_ref[...]


def _round_up(v, m):
    return ((v + m - 1) // m) * m


def flatten_pallas(x):
    """Pallas equivalent of Flatten.forward: returns x reshaped to (N, -1)."""
    n = x.shape[0]
    chw = math.prod(x.shape[1:]) if x.ndim > 1 else 1
    total = n * chw
    itemsize = jnp.dtype(x.dtype).itemsize

    # NOTE: jnp.reshape(x, (n, -1)) on a contiguous array is metadata-only;
    # the pallas_call exists to materialize the flatten as an explicit copy.
    # TODO(synk): in a real model, fuse this flatten into the consumer
    # kernel's BlockSpec instead of paying a standalone HBM round trip.

    # ---- slab geometry, decoupled from N and C*H*W --------------------------
    cols = 512 if total >= 8 * 512 else 128       # lane dim: multiple of 128
    rows = pl.cdiv(total, cols)

    sublane = 8 * max(1, 4 // itemsize)           # 8 f32 / 16 bf16 / 32 int8
    tile_budget_bytes = 2 * 1024 * 1024           # per tile; x4 buffers ~ 8 MiB
    rb = max(sublane, tile_budget_bytes // (cols * itemsize))
    rb = min(rb, _round_up(rows, sublane))
    rb = (rb // sublane) * sublane

    rows_padded = _round_up(rows, rb)
    padded_total = rows_padded * cols

    flat = x.reshape(total)
    if padded_total != total:
        flat = jnp.pad(flat, (0, padded_total - total))
    slab = flat.reshape(rows_padded, cols)

    grid = (rows_padded // rb,)

    out = pl.pallas_call(
        _copy_kernel,
        out_shape=jax.ShapeDtypeStruct((rows_padded, cols), x.dtype),
        grid=grid,
        in_specs=[pl.BlockSpec((rb, cols), lambda i: (i, 0))],
        out_specs=pl.BlockSpec((rb, cols), lambda i: (i, 0)),
        compiler_params=pltpu.CompilerParams(
            dimension_semantics=("parallel",)),
        cost_estimate=pl.CostEstimate(
            flops=0,
            transcendentals=0,
            bytes_accessed=2 * padded_total * itemsize),
    )(slab)

    flat_out = out.reshape(padded_total)
    if padded_total != total:
        flat_out = flat_out[:total]
    return flat_out.reshape(n, chw)


if __name__ == "__main__":
    key = jax.random.PRNGKey(0)

    # Primary test: small NCHW input consistent with the module's usage.
    x = jax.random.normal(key, (2, 4, 16, 16), dtype=jnp.float32)
    out = flatten_pallas(x)
    jax.block_until_ready(out)
    ref = x.reshape(x.shape[0], -1)
    assert out.shape == (2, 4 * 16 * 16), out.shape
    assert out.dtype == x.dtype
    assert bool(jnp.array_equal(out, ref))

    # Secondary test: non-tile-aligned shape exercises the pad/unpad path.
    y = jax.random.normal(jax.random.PRNGKey(1), (2, 3, 7, 5), dtype=jnp.float32)
    out_y = flatten_pallas(y)
    jax.block_until_ready(out_y)
    assert out_y.shape == (2, 3 * 7 * 5), out_y.shape
    assert bool(jnp.array_equal(out_y, y.reshape(y.shape[0], -1)))

    print("KERNEL_OK")
</pallas_src>

<mosaic_0001>
module attributes {stable_mosaic.version = 11 : i64} {
  func.func @_copy_kernel(%arg0: i32, %arg1: memref<16x128xf32, #tpu.memory_space<vmem>>, %arg2: memref<16x128xf32, #tpu.memory_space<vmem>>) attributes {dimension_semantics = [#tpu.dimension_semantics<parallel>], iteration_bounds = array<i64: 1>, scalar_prefetch = 0 : i64, scratch_operands = 0 : i64, tpu.core_type = #tpu.core_type<tc>, window_params = [{transform_indices = @transform_0, window_bounds = array<i64: 16, 128>}, {transform_indices = @transform_1, window_bounds = array<i64: 16, 128>}]} {
    %c0 = arith.constant 0 : index
    %c0_0 = arith.constant 0 : index
    %0 = vector.load %arg1[%c0, %c0_0] : memref<16x128xf32, #tpu.memory_space<vmem>>, vector<16x128xf32>
    %c0_1 = arith.constant 0 : index
    %c0_2 = arith.constant 0 : index
    %1 = vector.load %arg2[%c0_1, %c0_2] : memref<16x128xf32, #tpu.memory_space<vmem>>, vector<16x128xf32>
    tpu.vector_store %arg2[%c0_1, %c0_2], %0 {strides = array<i32>} : memref<16x128xf32, #tpu.memory_space<vmem>>, vector<16x128xf32>,
    return
  }
  func.func @transform_0(%arg0: i32) -> (i32, i32) {
    %c0_i32 = arith.constant 0 : i32
    %c0_i32_0 = arith.constant 0 : i32
    return %arg0, %c0_i32 : i32, i32
  }
  func.func @transform_1(%arg0: i32) -> (i32, i32) {
    %c0_i32 = arith.constant 0 : i32
    %c0_i32_0 = arith.constant 0 : i32
    return %arg0, %c0_i32 : i32, i32
  }
}

</mosaic_0001>

<llo_original>
// kernel: tpu_custom_call.1
$region0: #{tpu_custom_call.1}
  #allocation0 [shape = 'u32[]', space=smem, size = 0x4, offset = 0x4, fixed_abs, tag = 'smem constant byte address 0x4 - core index']
  #allocation1 [shape = 'u32[144,128]{1,0:T(1,128)}', space=vmem, size = 0x12000, scoped, tag = 'internal scratch']
  %s0 = inlined_call_operand.hbm [shape: f32[16,128], index: 0, kind: input, shape index: {}]
  %s1 = inlined_call_operand.hbm [shape: f32[16,128], index: 1, kind: output, shape index: {}]
  %s2 = sld [smem:[#allocation0]]
  $region18: #{tpu_custom_call.1} parent=0
    _
  %s4 = ssub.s32 1, %s2
  %s5 = scalar_select 0, %s4, %s2
  $region1: #{tpu_custom_call.1} parent=0
    #allocation2 [shape = 'u8[8192]{0}', space=vmem, size = 0x2000, scoped, tag = 'input window, operand 0, single buffered']
    #allocation3 [shape = 's32[1]{0}', space=sflag, size = 0x4, scoped, tag = 'scoped memory for tpu_custom_call.1']
    #allocation4 [shape = 's32[1]{0}', space=sflag, size = 0x4, scoped, tag = 'scoped memory for tpu_custom_call.1']
    #allocation5 [shape = 'u8[8192]{0}', space=vmem, size = 0x2000, scoped, tag = 'output window, operand 0, single buffered']
    %6 = vsyncpa [#allocation3], 0
    %7 = vsyncpa [#allocation4], 0
    // Predicated region
    $region2: #{tpu_custom_call.1} parent=1 // pred_check
      _
    $region3: #{tpu_custom_call.1} parent=1 // pred_check_branch
      %9 = sbr.rel (0) target = $region5
    $region4: #{tpu_custom_call.1} parent=1 // pred_region
      %s11 = ssub.s32 256, 256
      %12 = vsyncadd [#allocation3], %s11
      %s13 = sshll.u32 [#allocation2], 4
      %s14 = int_to_ptr.vmem [resolvable:$true] %s13
      %19 = dma.hbm_to_vmem [thread:$0]  %s0, 256, %s14, [#allocation3], 128, 128, 8
    $region5: #{tpu_custom_call.1} parent=1 // pred_fallthru
      _
    // Predicated region
    $region6: #{tpu_custom_call.1} parent=1 // pred_check
      _
    $region7: #{tpu_custom_call.1} parent=1 // pred_check_branch
      %21 = sbr.rel (0) target = $region9
    $region8: #{tpu_custom_call.1} parent=1 // pred_region
      %22 = dma.done [#allocation3], 256
    $region9: #{tpu_custom_call.1} parent=1 // pred_fallthru
      _
    %v23 = vld [vmem:[#allocation2] sm:$0xff]
    %v24 = vld [vmem:[#allocation2 + $0x8] sm:$0xff]
    %25 = vst [vmem:[#allocation5] sm:$0xff] %v23
    %26 = vst [vmem:[#allocation5 + $0x8] sm:$0xff] %v24
    // Predicated region
    $region10: #{tpu_custom_call.1} parent=1 // pred_check
      _
    $region11: #{tpu_custom_call.1} parent=1 // pred_check_branch
      %28 = sbr.rel (0) target = $region13
    $region12: #{tpu_custom_call.1} parent=1 // pred_region
      %s30 = ssub.s32 256, 256
      %31 = vsyncadd [#allocation4], %s30
      %s32 = sshll.u32 [#allocation5], 4
      %s33 = int_to_ptr.vmem [resolvable:$true] %s32
      %38 = dma.vmem_to_hbm [thread:$0]  %s33, 256, %s1, [#allocation4], 128, 128, 8
    $region13: #{tpu_custom_call.1} parent=1 // pred_fallthru
      _
    // Predicated region
    $region14: #{tpu_custom_call.1} parent=1 // pred_check
      _
    $region15: #{tpu_custom_call.1} parent=1 // pred_check_branch
      %40 = sbr.rel (0) target = $region17
    $region16: #{tpu_custom_call.1} parent=1 // pred_region
      %41 = dma.done [#allocation4], 256
    $region17: #{tpu_custom_call.1} parent=1 // pred_fallthru
      _
    %42 = vsyncpa [#allocation3], 1
    %43 = vsyncpa [#allocation4], 1

</llo_original>
